<compile_context>
chip_gen: v5e
topology: v5e:2x2
jax: 0.10.0
libtpu: 0.0.40
codegen_flags: <defaults>
</compile_context>

<pallas_src>
import jax
import jax.numpy as jnp
from jax.experimental import pallas as pl
from jax.experimental.pallas import tpu as pltpu

_LANES = 128


def _swish_kernel(x_ref, o_ref):
    x = x_ref[...]
    # Compute in f32 (v5e VPU/EUP have no bf16); no-op cast for f32 inputs.
    xf = x.astype(jnp.float32)
    # sigmoid(x) == 0.5 * tanh(0.5 * x) + 0.5  -> single EUP tanh + 2 VALU ops.
    sig = 0.5 * jnp.tanh(0.5 * xf) + 0.5
    o_ref[...] = (xf * sig).astype(o_ref.dtype)


def _round_up(a, b):
    return ((a + b - 1) // b) * b


def _sublane_multiple(dtype):
    # f32 -> 8, bf16 -> 16, int8/fp8 -> 32 (sub-32-bit dtypes pack sublanes)
    itemsize = jnp.dtype(dtype).itemsize
    return 8 * max(1, 4 // itemsize)


def swish(x, *, tile_bytes=4 << 20, inplace=False):
    """Elementwise swish; accepts any shape, streams lane-dense (blk,128) tiles."""
    orig_shape = x.shape
    dtype = x.dtype
    if not jnp.issubdtype(dtype, jnp.floating):
        raise TypeError(f"swish kernel expects a floating dtype, got {dtype}")

    n = x.size
    if n == 0:
        return x

    itemsize = jnp.dtype(dtype).itemsize
    sub = _sublane_multiple(dtype)

    rows = pl.cdiv(n, _LANES)
    pad = rows * _LANES - n

    if pad == 0:
        # Common case (e.g. NCHW activations whose flat size divides 128):
        # pure reshape, no extra HBM pass.  Ragged sublane counts (rows % 8)
        # are fine — Pallas masks the ragged last grid block.
        x2d = jnp.reshape(x, (rows, _LANES))
    else:
        # TODO(synk): unaligned tail still costs one extra pass over input
        # (pad) and output (slice); see header comment.  swish(0) == 0, safe.
        x_flat = jnp.reshape(x, (-1,))
        x2d = jnp.reshape(jnp.pad(x_flat, (0, pad)), (rows, _LANES))

    # Byte-constant tiles (~tile_bytes each) regardless of dtype.
    block_rows = max(sub, (tile_bytes // (_LANES * itemsize)) // sub * sub)

    total_bytes = rows * _LANES * itemsize
    if total_bytes <= (2 << 20):
        # Small arrays: single full-array block (block == full dims is legal
        # even when rows % 8 != 0).
        blk = rows
    else:
        # >= 2 grid steps so v7x's two TensorCores both get work
        # (dimension_semantics="parallel" shards the grid across them).
        blk = min(block_rows, _round_up(pl.cdiv(rows, 2), sub))
    grid = (pl.cdiv(rows, blk),)

    # Right-size the scoped VMEM budget: in+out double-buffered tiles plus a
    # conservative allowance for f32 compute intermediates, with slack.
    tile_b = blk * _LANES * itemsize
    vmem_limit = int((4 * tile_b + 2 * blk * _LANES * 4) * 1.25) + (2 << 20)
    vmem_limit = min(max(vmem_limit, 4 << 20), 100 << 20)

    # Optional in-place path: avoids a second full-size HBM allocation when the
    # caller donates the input buffer.  Only valid when no padding reshuffle
    # happened (input and output buffers are then shape/dtype identical).
    aliases = {0: 0} if (inplace and pad == 0) else {}

    out2d = pl.pallas_call(
        _swish_kernel,
        out_shape=jax.ShapeDtypeStruct((rows, _LANES), dtype),
        grid=grid,
        in_specs=[pl.BlockSpec((blk, _LANES), lambda i: (i, 0))],
        out_specs=pl.BlockSpec((blk, _LANES), lambda i: (i, 0)),
        compiler_params=pltpu.CompilerParams(
            dimension_semantics=("parallel",),
            vmem_limit_bytes=vmem_limit,
        ),
        input_output_aliases=aliases,
    )(x2d)

    if pad == 0:
        return jnp.reshape(out2d, orig_shape)
    out_flat = jnp.reshape(out2d, (-1,))[:n]
    return jnp.reshape(out_flat, orig_shape)


if __name__ == "__main__":
    key = jax.random.PRNGKey(0)
    # Small NCHW activation, matching the module's elementwise forward.
    x = jax.random.normal(key, (2, 4, 16, 16), dtype=jnp.float32)

    y = jax.jit(swish)(x)
    y = jax.block_until_ready(y)

    # Reference check (plain JAX).
    y_ref = x * jax.nn.sigmoid(x)
    assert y.shape == x.shape and y.dtype == x.dtype
    assert jnp.max(jnp.abs(y - y_ref)) < 1e-5

    print("KERNEL_OK")
</pallas_src>

<mosaic_0001>
module attributes {stable_mosaic.version = 11 : i64} {
  func.func @_swish_kernel(%arg0: i32, %arg1: memref<16x128xf32, #tpu.memory_space<vmem>>, %arg2: memref<16x128xf32, #tpu.memory_space<vmem>>) attributes {dimension_semantics = [#tpu.dimension_semantics<parallel>], iteration_bounds = array<i64: 1>, scalar_prefetch = 0 : i64, scratch_operands = 0 : i64, tpu.core_type = #tpu.core_type<tc>, window_params = [{transform_indices = @transform_0, window_bounds = array<i64: 16, 128>}, {transform_indices = @transform_1, window_bounds = array<i64: 16, 128>}]} {
    %c0 = arith.constant 0 : index
    %c0_0 = arith.constant 0 : index
    %0 = vector.load %arg1[%c0, %c0_0] : memref<16x128xf32, #tpu.memory_space<vmem>>, vector<16x128xf32>
    %cst = arith.constant 5.000000e-01 : f32
    %1 = vector.broadcast %cst : f32 to vector<16x128xf32>
    %2 = arith.mulf %1, %0 : vector<16x128xf32>
    %3 = math.tanh %2 : vector<16x128xf32>
    %cst_1 = arith.constant 5.000000e-01 : f32
    %4 = vector.broadcast %cst_1 : f32 to vector<16x128xf32>
    %5 = arith.mulf %4, %3 : vector<16x128xf32>
    %cst_2 = arith.constant 5.000000e-01 : f32
    %6 = vector.broadcast %cst_2 : f32 to vector<16x128xf32>
    %7 = arith.addf %5, %6 : vector<16x128xf32>
    %8 = arith.mulf %0, %7 : vector<16x128xf32>
    %c0_3 = arith.constant 0 : index
    %c0_4 = arith.constant 0 : index
    %9 = vector.load %arg2[%c0_3, %c0_4] : memref<16x128xf32, #tpu.memory_space<vmem>>, vector<16x128xf32>
    tpu.vector_store %arg2[%c0_3, %c0_4], %8 {strides = array<i32>} : memref<16x128xf32, #tpu.memory_space<vmem>>, vector<16x128xf32>,
    return
  }
  func.func @transform_0(%arg0: i32) -> (i32, i32) {
    %c0_i32 = arith.constant 0 : i32
    %c0_i32_0 = arith.constant 0 : i32
    return %arg0, %c0_i32 : i32, i32
  }
  func.func @transform_1(%arg0: i32) -> (i32, i32) {
    %c0_i32 = arith.constant 0 : i32
    %c0_i32_0 = arith.constant 0 : i32
    return %arg0, %c0_i32 : i32, i32
  }
}

</mosaic_0001>

<llo_original>
// kernel: swish.1
$region0: #{swish.1}
  #allocation0 [shape = 'u32[]', space=smem, size = 0x4, offset = 0x4, fixed_abs, tag = 'smem constant byte address 0x4 - core index']
  #allocation1 [shape = 'u32[72,128]{1,0:T(1,128)}', space=vmem, size = 0x9000, scoped, tag = 'internal scratch']
  %s0 = inlined_call_operand.vmem [shape: f32[16,128], index: 0, kind: input, shape index: {}]
  %s1 = inlined_call_operand.vmem [shape: f32[16,128], index: 1, kind: output, shape index: {}]
  %s2 = sld [smem:[#allocation0]]
  $region14: #{swish.1} parent=0
    _
  %s4 = ssub.s32 1, %s2
  %s5 = scalar_select 0, %s4, %s2
  // Predicated region
  $region2: #{swish.1} parent=0 // pred_check
    _
  $region3: #{swish.1} parent=0 // pred_check_branch
    %7 = sbr.rel (0) target = $region5
  $region4: #{swish.1} parent=0 // pred_region
    _
  $region5: #{swish.1} parent=0 // pred_fallthru
    _
  %v8 = vld [vmem:[%s0] sm:$0xff]
  %v9 = vld [vmem:[%s0 + $0x8] sm:$0xff]
  %v10 = vmul.f32 %v8, 0.5
  %v11 = vmul.f32 %v9, 0.5
  %v12 = vtanh.pop %v10
  %v13 = vtanh.pop %v11
  %v14 = vmul.f32 %v12, 0.5
  %v15 = vmul.f32 %v13, 0.5
  %v16 = vadd.f32 %v14, 0.5
  %v17 = vadd.f32 %v15, 0.5
  %v18 = vmul.f32 %v8, %v16
  %v19 = vmul.f32 %v9, %v17
  %20 = vst [vmem:[%s1] sm:$0xff] %v18
  %21 = vst [vmem:[%s1 + $0x8] sm:$0xff] %v19
  // Predicated region
  $region6: #{swish.1} parent=0 // pred_check
    _
  $region7: #{swish.1} parent=0 // pred_check_branch
    %23 = sbr.rel (0) target = $region9
  $region8: #{swish.1} parent=0 // pred_region
    _
  $region9: #{swish.1} parent=0 // pred_fallthru
    _
  // Predicated region
  $region10: #{swish.1} parent=0 // pred_check
    _
  $region11: #{swish.1} parent=0 // pred_check_branch
    %25 = sbr.rel (0) target = $region13
  $region12: #{swish.1} parent=0 // pred_region
    _
  $region13: #{swish.1} parent=0 // pred_fallthru
    _

</llo_original>
